<compile_context>
chip_gen: v6e
topology: v6e:2x2x1
jax: 0.10.0
libtpu: 0.0.40
codegen_flags: <defaults>
</compile_context>

<pallas_src>
import functools

import jax
import jax.numpy as jnp
from jax.experimental import pallas as pl
from jax.experimental.pallas import tpu as pltpu

_LANES = 128
_UNROLL = 8                      # 128-lane chunks per fori_loop group
_GROUP = _UNROLL * _LANES        # 1024 lanes per group


def _round_up(x, m):
    return ((x + m - 1) // m) * m


def _cdiv(a, b):
    return (a + b - 1) // b


def _default_num_parallel():
    """2-way split only on 2-TensorCore chips (v7x); 1 on v5e/v6e."""
    try:
        kind = jax.devices()[0].device_kind.lower()
    except Exception:
        return 1
    return 2 if ("v7" in kind or "7x" in kind) else 1


def _chunk_stats(x, t):
    """(p*t, p, t) for one (n, 128) chunk; sigmoid via one EUP tanh."""
    p = 0.5 * jnp.tanh(0.5 * x.astype(jnp.float32)) + 0.5
    tf = t.astype(jnp.float32)
    return p * tf, p, tf


def _accumulate(logits_ref, targets_ref, acc_ref, valid_lanes):
    """Fold lanes [0, valid_lanes) of the current tile into acc_ref.

    Chunk-fused: only (n, 128) partials are live at any time (no full-tile
    f32 temporaries -> no vreg spills even for multi-MB tiles).
    """
    n = logits_ref.shape[0]
    zero = jnp.zeros((n, _LANES), jnp.float32)
    pt, sp, st = zero, zero, zero

    # Bulk of the tile: fori_loop over 1024-lane groups (bounded codegen).
    full_groups = valid_lanes // _GROUP
    if full_groups > 0:
        def body(g, carry):
            pt, sp, st = carry
            for j in range(_UNROLL):
                start = pl.multiple_of(g * _GROUP + j * _LANES, _LANES)
                dpt, dsp, dst = _chunk_stats(
                    logits_ref[:, pl.ds(start, _LANES)],
                    targets_ref[:, pl.ds(start, _LANES)])
                pt, sp, st = pt + dpt, sp + dsp, st + dst
            return pt, sp, st

        pt, sp, st = jax.lax.fori_loop(0, full_groups, body, (pt, sp, st))

    # Static tail: remaining full 128-lane chunks.
    base = full_groups * _GROUP
    rem = valid_lanes - base
    for j in range(rem // _LANES):
        sl = slice(base + j * _LANES, base + (j + 1) * _LANES)
        dpt, dsp, dst = _chunk_stats(logits_ref[:, sl], targets_ref[:, sl])
        pt, sp, st = pt + dpt, sp + dsp, st + dst

    # Last partial chunk (< 128 valid lanes).  Keep the SELECT form: OOB lanes
    # of a boundary tile may hold garbage (even NaN after tanh); jnp.where
    # discards it, whereas `mask * p` would propagate NaN.
    last = rem % _LANES
    if last > 0:
        start = base + (rem // _LANES) * _LANES
        sl = slice(start, start + _LANES)
        dpt, dsp, dst = _chunk_stats(logits_ref[:, sl], targets_ref[:, sl])
        valid = jax.lax.broadcasted_iota(jnp.int32, (n, _LANES), 1) < last
        pt = pt + jnp.where(valid, dpt, 0.0)
        sp = sp + jnp.where(valid, dsp, 0.0)
        st = st + jnp.where(valid, dst, 0.0)

    # Packed accumulator: one output ref, three lane-dense (n, 128) slabs.
    acc_ref[0, :, :] += pt
    acc_ref[1, :, :] += sp
    acc_ref[2, :, :] += st


def _tversky_kernel(logits_ref, targets_ref, acc_ref, *, d, tile_d, k_per,
                    full_blocks, has_partial, has_phantom):
    k = pl.program_id(1)

    @pl.when(k == 0)
    def _init():
        acc_ref[...] = jnp.zeros(acc_ref.shape, acc_ref.dtype)

    if not has_partial and not has_phantom:
        # Every tile is fully interior: single unmasked fast path.
        _accumulate(logits_ref, targets_ref, acc_ref, tile_d)
        return

    g = pl.program_id(0) * k_per + k          # unclamped global block index

    if full_blocks > 0:
        @pl.when(g < full_blocks)
        def _interior():                       # unmasked fast path
            _accumulate(logits_ref, targets_ref, acc_ref, tile_d)

    if has_partial:
        rem = d - full_blocks * tile_d         # static, 0 < rem < tile_d
        @pl.when(g == full_blocks)
        def _boundary():                       # only this tile pays the mask
            _accumulate(logits_ref, targets_ref, acc_ref, rem)

    # Phantom blocks of the parallel split (g past the last real block) fall
    # through: their clamped re-read is ignored and no compute is issued.


def tversky_loss(logits, targets, *, alpha=0.5, beta=0.5, smooth=1e-6,
                 tile_d=None, num_parallel=None,
                 block_target_bytes=4 << 20):
    """Pallas TPU implementation of TverskyLoss.forward (logits, targets)."""
    n = logits.shape[0]
    logits2d = logits.reshape(n, -1)
    targets2d = targets.reshape(n, -1)
    d = logits2d.shape[1]

    # Tiny-D only: pad the lane axis to one full 128-lane tile (trivial copy);
    # the kernel masks lanes >= d, so pad values never contribute.
    if d < _LANES:
        pad = _LANES - d
        logits2d = jnp.pad(logits2d, ((0, 0), (0, pad)))
        targets2d = jnp.pad(targets2d, ((0, 0), (0, pad)))
    width = logits2d.shape[1]
    max_tile = (width // _LANES) * _LANES      # largest 128-multiple <= width

    # ---- tile sizing: MB-scale blocks amortize grid-step overhead; cap for
    # VMEM (2 inputs x 2 pipeline buffers per step fits every generation). ----
    if tile_d is None:
        target_elems = max(block_target_bytes // 4, _LANES)   # ~1M f32 elems
        tile_d = _cdiv(target_elems, n)
    tile_d = max(_LANES, _round_up(int(tile_d), _LANES))
    tile_d = min(tile_d, max_tile)

    nblocks = _cdiv(width, tile_d)
    full_blocks = d // tile_d
    has_partial = (d % tile_d) != 0

    if num_parallel is None:
        num_parallel = _default_num_parallel()
    num_parallel = max(1, min(int(num_parallel), nblocks))
    k_per = _cdiv(nblocks, num_parallel)
    has_phantom = num_parallel * k_per != nblocks

    if has_phantom:
        last_block = nblocks - 1
        # Phantom steps of the split re-read the last real block (their
        # compute is skipped in-kernel).  Only possible when num_parallel > 1.
        def in_map(c, k):
            return (0, jnp.minimum(c * k_per + k, last_block))
    else:
        def in_map(c, k):
            return (0, c * k_per + k)

    out_map = lambda c, k: (c, 0, 0, 0)
    acc_shape = jax.ShapeDtypeStruct((num_parallel, 3, n, _LANES), jnp.float32)
    acc_spec = pl.BlockSpec((None, 3, n, _LANES), out_map)  # per-slice resident

    # VMEM budget: 2 inputs x 2 buffers x block + packed accumulator + slack.
    block_bytes = n * tile_d * 4
    vmem_need = 2 * 2 * block_bytes + 2 * 3 * n * _LANES * 4 + (4 << 20)
    vmem_limit = int(min(max(vmem_need, 32 << 20), 48 << 20))

    kernel = functools.partial(
        _tversky_kernel, d=d, tile_d=tile_d, k_per=k_per,
        full_blocks=full_blocks, has_partial=has_partial,
        has_phantom=has_phantom)

    acc = pl.pallas_call(
        kernel,
        out_shape=acc_shape,
        grid_spec=pltpu.PrefetchScalarGridSpec(
            num_scalar_prefetch=0,
            grid=(num_parallel, k_per),
            in_specs=[
                pl.BlockSpec((n, tile_d), in_map),
                pl.BlockSpec((n, tile_d), in_map),
            ],
            out_specs=acc_spec,
        ),
        compiler_params=pltpu.CompilerParams(
            dimension_semantics=("parallel", "arbitrary"),
            vmem_limit_bytes=vmem_limit),
    )(logits2d, targets2d)

    # Tiny JAX epilogue: one cross-lane reduce, then the exact reference math
    # with FP = sum(p) - TP and FN = sum(t) - TP.
    sums = jnp.sum(acc, axis=(0, 3))          # (3, n): [sum p*t, sum p, sum t]
    tp, sp, st = sums[0], sums[1], sums[2]
    fp = sp - tp
    fn = st - tp
    tversky_index = (tp + smooth) / (tp + alpha * fp + beta * fn + smooth)
    return jnp.mean(1.0 - tversky_index)


def _tversky_ref(logits, targets, alpha=0.5, beta=0.5, smooth=1e-6):
    p = jax.nn.sigmoid(logits.astype(jnp.float32)).reshape(logits.shape[0], -1)
    t = targets.astype(jnp.float32).reshape(targets.shape[0], -1)
    tp = jnp.sum(p * t, axis=1)
    fp = jnp.sum(p * (1 - t), axis=1)
    fn = jnp.sum((1 - p) * t, axis=1)
    ti = (tp + smooth) / (tp + alpha * fp + beta * fn + smooth)
    return jnp.mean(1.0 - ti)


if __name__ == "__main__":
    key = jax.random.PRNGKey(0)
    k1, k2, k3, k4, k5, k6 = jax.random.split(key, 6)

    # Case 1: (N, C, H, W) logits with binary targets, default tiling
    # (auto tile size, auto num_parallel).
    logits = jax.random.normal(k1, (2, 4, 16, 16), dtype=jnp.float32)
    targets = (jax.random.uniform(k2, (2, 4, 16, 16)) > 0.5).astype(jnp.float32)
    loss = tversky_loss(logits, targets)
    jax.block_until_ready(loss)
    ref = _tversky_ref(logits, targets)
    assert jnp.allclose(loss, ref, atol=1e-5, rtol=1e-5), (loss, ref)

    # Case 2: bf16 targets, non-default alpha/beta, forced multi-tile grid with
    # a partial boundary tile and a 2-way parallel split (no phantom tiles).
    logits2 = jax.random.normal(k3, (4, 8, 24, 24), dtype=jnp.float32)
    targets2 = (jax.random.uniform(k4, (4, 8, 24, 24)) > 0.5).astype(jnp.bfloat16)
    loss2 = tversky_loss(logits2, targets2, alpha=0.7, beta=0.3,
                         tile_d=1280, num_parallel=2)
    jax.block_until_ready(loss2)
    ref2 = _tversky_ref(logits2, targets2, alpha=0.7, beta=0.3)
    assert jnp.allclose(loss2, ref2, atol=1e-5, rtol=1e-5), (loss2, ref2)

    # Case 3: bf16 logits, D not a multiple of 128, odd block count with a
    # 2-way split (exercises the clamped phantom tile + masked boundary chunk).
    logits3 = jax.random.normal(k5, (3, 2500), dtype=jnp.bfloat16)
    targets3 = (jax.random.uniform(k6, (3, 2500)) > 0.5).astype(jnp.float32)
    loss3 = tversky_loss(logits3, targets3, tile_d=1024, num_parallel=2)
    jax.block_until_ready(loss3)
    ref3 = _tversky_ref(logits3, targets3)
    assert jnp.allclose(loss3, ref3, atol=1e-5, rtol=1e-5), (loss3, ref3)

    print("KERNEL_OK")
</pallas_src>

<mosaic_0001>
module attributes {stable_mosaic.version = 11 : i64} {
  func.func @_tversky_kernel(%arg0: i32, %arg1: i32, %arg2: memref<2x1024xf32, #tpu.memory_space<vmem>>, %arg3: memref<2x1024xf32, #tpu.memory_space<vmem>>, %arg4: memref<1x3x2x128xf32, #tpu.memory_space<vmem>>) attributes {dimension_semantics = [#tpu.dimension_semantics<parallel>, #tpu.dimension_semantics<arbitrary>], iteration_bounds = array<i64: 1, 1>, scalar_prefetch = 0 : i64, scratch_operands = 0 : i64, tpu.core_type = #tpu.core_type<tc>, window_params = [{transform_indices = @transform_0, window_bounds = array<i64: 2, 1024>}, {transform_indices = @transform_1, window_bounds = array<i64: 2, 1024>}, {transform_indices = @transform_2, window_bounds = array<i64: 1, 3, 2, 128>}]} {
    %c0_i32 = arith.constant 0 : i32
    %0 = arith.cmpi eq, %arg1, %c0_i32 : i32
    %1 = arith.extui %0 : i1 to i32
    %c0_i32_0 = arith.constant 0 : i32
    %2 = arith.cmpi ne, %1, %c0_i32_0 : i32
    scf.if %2 {
      %cst_71 = arith.constant 0.000000e+00 : f32
      %166 = vector.broadcast %cst_71 : f32 to vector<3x2x128xf32>
      %c0_72 = arith.constant 0 : index
      %c0_73 = arith.constant 0 : index
      %c0_74 = arith.constant 0 : index
      %c0_75 = arith.constant 0 : index
      %167 = vector.load %arg4[%c0_72, %c0_73, %c0_74, %c0_75] : memref<1x3x2x128xf32, #tpu.memory_space<vmem>>, vector<1x3x2x128xf32>
      %168 = vector.shape_cast %167 : vector<1x3x2x128xf32> to vector<3x2x128xf32>
      %169 = vector.shape_cast %166 : vector<3x2x128xf32> to vector<1x3x2x128xf32>
      tpu.vector_store %arg4[%c0_72, %c0_73, %c0_74, %c0_75], %169 {strides = array<i32>} : memref<1x3x2x128xf32, #tpu.memory_space<vmem>>, vector<1x3x2x128xf32>,
    } else {
    }
    %cst = arith.constant 0.000000e+00 : f32
    %3 = vector.broadcast %cst : f32 to vector<2x128xf32>
    %c0_i32_1 = arith.constant 0 : i32
    %c1024_i32 = arith.constant 1024 : i32
    %4 = arith.muli %c0_i32_1, %c1024_i32 : i32
    %c0_i32_2 = arith.constant 0 : i32
    %5 = arith.addi %4, %c0_i32_2 : i32
    %6 = tpu.assume_multiple %5, 128 : i32
    %c0 = arith.constant 0 : index
    %7 = arith.index_cast %6 : i32 to index
    %8 = vector.load %arg2[%c0, %7] : memref<2x1024xf32, #tpu.memory_space<vmem>>, vector<2x128xf32>
    %c0_3 = arith.constant 0 : index
    %9 = arith.index_cast %6 : i32 to index
    %10 = vector.load %arg3[%c0_3, %9] : memref<2x1024xf32, #tpu.memory_space<vmem>>, vector<2x128xf32>
    %cst_4 = arith.constant 5.000000e-01 : f32
    %11 = vector.broadcast %cst_4 : f32 to vector<2x128xf32>
    %12 = arith.mulf %11, %8 : vector<2x128xf32>
    %13 = math.tanh %12 : vector<2x128xf32>
    %cst_5 = arith.constant 5.000000e-01 : f32
    %14 = vector.broadcast %cst_5 : f32 to vector<2x128xf32>
    %15 = arith.mulf %14, %13 : vector<2x128xf32>
    %cst_6 = arith.constant 5.000000e-01 : f32
    %16 = vector.broadcast %cst_6 : f32 to vector<2x128xf32>
    %17 = arith.addf %15, %16 : vector<2x128xf32>
    %18 = arith.mulf %17, %10 : vector<2x128xf32>
    %19 = arith.addf %3, %18 : vector<2x128xf32>
    %20 = arith.addf %3, %17 : vector<2x128xf32>
    %21 = arith.addf %3, %10 : vector<2x128xf32>
    %c1024_i32_7 = arith.constant 1024 : i32
    %22 = arith.muli %c0_i32_1, %c1024_i32_7 : i32
    %c128_i32 = arith.constant 128 : i32
    %23 = arith.addi %22, %c128_i32 : i32
    %24 = tpu.assume_multiple %23, 128 : i32
    %c0_8 = arith.constant 0 : index
    %25 = arith.index_cast %24 : i32 to index
    %26 = vector.load %arg2[%c0_8, %25] : memref<2x1024xf32, #tpu.memory_space<vmem>>, vector<2x128xf32>
    %c0_9 = arith.constant 0 : index
    %27 = arith.index_cast %24 : i32 to index
    %28 = vector.load %arg3[%c0_9, %27] : memref<2x1024xf32, #tpu.memory_space<vmem>>, vector<2x128xf32>
    %cst_10 = arith.constant 5.000000e-01 : f32
    %29 = vector.broadcast %cst_10 : f32 to vector<2x128xf32>
    %30 = arith.mulf %29, %26 : vector<2x128xf32>
    %31 = math.tanh %30 : vector<2x128xf32>
    %cst_11 = arith.constant 5.000000e-01 : f32
    %32 = vector.broadcast %cst_11 : f32 to vector<2x128xf32>
    %33 = arith.mulf %32, %31 : vector<2x128xf32>
    %cst_12 = arith.constant 5.000000e-01 : f32
    %34 = vector.broadcast %cst_12 : f32 to vector<2x128xf32>
    %35 = arith.addf %33, %34 : vector<2x128xf32>
    %36 = arith.mulf %35, %28 : vector<2x128xf32>
    %37 = arith.addf %19, %36 : vector<2x128xf32>
    %38 = arith.addf %20, %35 : vector<2x128xf32>
    %39 = arith.addf %21, %28 : vector<2x128xf32>
    %c1024_i32_13 = arith.constant 1024 : i32
    %40 = arith.muli %c0_i32_1, %c1024_i32_13 : i32
    %c256_i32 = arith.constant 256 : i32
    %41 = arith.addi %40, %c256_i32 : i32
    %42 = tpu.assume_multiple %41, 128 : i32
    %c0_14 = arith.constant 0 : index
    %43 = arith.index_cast %42 : i32 to index
    %44 = vector.load %arg2[%c0_14, %43] : memref<2x1024xf32, #tpu.memory_space<vmem>>, vector<2x128xf32>
    %c0_15 = arith.constant 0 : index
    %45 = arith.index_cast %42 : i32 to index
    %46 = vector.load %arg3[%c0_15, %45] : memref<2x1024xf32, #tpu.memory_space<vmem>>, vector<2x128xf32>
    %cst_16 = arith.constant 5.000000e-01 : f32
    %47 = vector.broadcast %cst_16 : f32 to vector<2x128xf32>
    %48 = arith.mulf %47, %44 : vector<2x128xf32>
    %49 = math.tanh %48 : vector<2x128xf32>
    %cst_17 = arith.constant 5.000000e-01 : f32
    %50 = vector.broadcast %cst_17 : f32 to vector<2x128xf32>
    %51 = arith.mulf %50, %49 : vector<2x128xf32>
    %cst_18 = arith.constant 5.000000e-01 : f32
    %52 = vector.broadcast %cst_18 : f32 to vector<2x128xf32>
    %53 = arith.addf %51, %52 : vector<2x128xf32>
    %54 = arith.mulf %53, %46 : vector<2x128xf32>
    %55 = arith.addf %37, %54 : vector<2x128xf32>
    %56 = arith.addf %38, %53 : vector<2x128xf32>
    %57 = arith.addf %39, %46 : vector<2x128xf32>
    %c1024_i32_19 = arith.constant 1024 : i32
    %58 = arith.muli %c0_i32_1, %c1024_i32_19 : i32
    %c384_i32 = arith.constant 384 : i32
    %59 = arith.addi %58, %c384_i32 : i32
    %60 = tpu.assume_multiple %59, 128 : i32
    %c0_20 = arith.constant 0 : index
    %61 = arith.index_cast %60 : i32 to index
    %62 = vector.load %arg2[%c0_20, %61] : memref<2x1024xf32, #tpu.memory_space<vmem>>, vector<2x128xf32>
    %c0_21 = arith.constant 0 : index
    %63 = arith.index_cast %60 : i32 to index
    %64 = vector.load %arg3[%c0_21, %63] : memref<2x1024xf32, #tpu.memory_space<vmem>>, vector<2x128xf32>
    %cst_22 = arith.constant 5.000000e-01 : f32
    %65 = vector.broadcast %cst_22 : f32 to vector<2x128xf32>
    %66 = arith.mulf %65, %62 : vector<2x128xf32>
    %67 = math.tanh %66 : vector<2x128xf32>
    %cst_23 = arith.constant 5.000000e-01 : f32
    %68 = vector.broadcast %cst_23 : f32 to vector<2x128xf32>
    %69 = arith.mulf %68, %67 : vector<2x128xf32>
    %cst_24 = arith.constant 5.000000e-01 : f32
    %70 = vector.broadcast %cst_24 : f32 to vector<2x128xf32>
    %71 = arith.addf %69, %70 : vector<2x128xf32>
    %72 = arith.mulf %71, %64 : vector<2x128xf32>
    %73 = arith.addf %55, %72 : vector<2x128xf32>
    %74 = arith.addf %56, %71 : vector<2x128xf32>
    %75 = arith.addf %57, %64 : vector<2x128xf32>
    %c1024_i32_25 = arith.constant 1024 : i32
    %76 = arith.muli %c0_i32_1, %c1024_i32_25 : i32
    %c512_i32 = arith.constant 512 : i32
    %77 = arith.addi %76, %c512_i32 : i32
    %78 = tpu.assume_multiple %77, 128 : i32
    %c0_26 = arith.constant 0 : index
    %79 = arith.index_cast %78 : i32 to index
    %80 = vector.load %arg2[%c0_26, %79] : memref<2x1024xf32, #tpu.memory_space<vmem>>, vector<2x128xf32>
    %c0_27 = arith.constant 0 : index
    %81 = arith.index_cast %78 : i32 to index
    %82 = vector.load %arg3[%c0_27, %81] : memref<2x1024xf32, #tpu.memory_space<vmem>>, vector<2x128xf32>
    %cst_28 = arith.constant 5.000000e-01 : f32
    %83 = vector.broadcast %cst_28 : f32 to vector<2x128xf32>
    %84 = arith.mulf %83, %80 : vector<2x128xf32>
    %85 = math.tanh %84 : vector<2x128xf32>
    %cst_29 = arith.constant 5.000000e-01 : f32
    %86 = vector.broadcast %cst_29 : f32 to vector<2x128xf32>
    %87 = arith.mulf %86, %85 : vector<2x128xf32>
    %cst_30 = arith.constant 5.000000e-01 : f32
    %88 = vector.broadcast %cst_30 : f32 to vector<2x128xf32>
    %89 = arith.addf %87, %88 : vector<2x128xf32>
    %90 = arith.mulf %89, %82 : vector<2x128xf32>
    %91 = arith.addf %73, %90 : vector<2x128xf32>
    %92 = arith.addf %74, %89 : vector<2x128xf32>
    %93 = arith.addf %75, %82 : vector<2x128xf32>
    %c1024_i32_31 = arith.constant 1024 : i32
    %94 = arith.muli %c0_i32_1, %c1024_i32_31 : i32
    %c640_i32 = arith.constant 640 : i32
    %95 = arith.addi %94, %c640_i32 : i32
    %96 = tpu.assume_multiple %95, 128 : i32
    %c0_32 = arith.constant 0 : index
    %97 = arith.index_cast %96 : i32 to index
    %98 = vector.load %arg2[%c0_32, %97] : memref<2x1024xf32, #tpu.memory_space<vmem>>, vector<2x128xf32>
    %c0_33 = arith.constant 0 : index
    %99 = arith.index_cast %96 : i32 to index
    %100 = vector.load %arg3[%c0_33, %99] : memref<2x1024xf32, #tpu.memory_space<vmem>>, vector<2x128xf32>
    %cst_34 = arith.constant 5.000000e-01 : f32
    %101 = vector.broadcast %cst_34 : f32 to vector<2x128xf32>
    %102 = arith.mulf %101, %98 : vector<2x128xf32>
    %103 = math.tanh %102 : vector<2x128xf32>
    %cst_35 = arith.constant 5.000000e-01 : f32
    %104 = vector.broadcast %cst_35 : f32 to vector<2x128xf32>
    %105 = arith.mulf %104, %103 : vector<2x128xf32>
    %cst_36 = arith.constant 5.000000e-01 : f32
    %106 = vector.broadcast %cst_36 : f32 to vector<2x128xf32>
    %107 = arith.addf %105, %106 : vector<2x128xf32>
    %108 = arith.mulf %107, %100 : vector<2x128xf32>
    %109 = arith.addf %91, %108 : vector<2x128xf32>
    %110 = arith.addf %92, %107 : vector<2x128xf32>
    %111 = arith.addf %93, %100 : vector<2x128xf32>
    %c1024_i32_37 = arith.constant 1024 : i32
    %112 = arith.muli %c0_i32_1, %c1024_i32_37 : i32
    %c768_i32 = arith.constant 768 : i32
    %113 = arith.addi %112, %c768_i32 : i32
    %114 = tpu.assume_multiple %113, 128 : i32
    %c0_38 = arith.constant 0 : index
    %115 = arith.index_cast %114 : i32 to index
    %116 = vector.load %arg2[%c0_38, %115] : memref<2x1024xf32, #tpu.memory_space<vmem>>, vector<2x128xf32>
    %c0_39 = arith.constant 0 : index
    %117 = arith.index_cast %114 : i32 to index
    %118 = vector.load %arg3[%c0_39, %117] : memref<2x1024xf32, #tpu.memory_space<vmem>>, vector<2x128xf32>
    %cst_40 = arith.constant 5.000000e-01 : f32
    %119 = vector.broadcast %cst_40 : f32 to vector<2x128xf32>
    %120 = arith.mulf %119, %116 : vector<2x128xf32>
    %121 = math.tanh %120 : vector<2x128xf32>
    %cst_41 = arith.constant 5.000000e-01 : f32
    %122 = vector.broadcast %cst_41 : f32 to vector<2x128xf32>
    %123 = arith.mulf %122, %121 : vector<2x128xf32>
    %cst_42 = arith.constant 5.000000e-01 : f32
    %124 = vector.broadcast %cst_42 : f32 to vector<2x128xf32>
    %125 = arith.addf %123, %124 : vector<2x128xf32>
    %126 = arith.mulf %125, %118 : vector<2x128xf32>
    %127 = arith.addf %109, %126 : vector<2x128xf32>
    %128 = arith.addf %110, %125 : vector<2x128xf32>
    %129 = arith.addf %111, %118 : vector<2x128xf32>
    %c1024_i32_43 = arith.constant 1024 : i32
    %130 = arith.muli %c0_i32_1, %c1024_i32_43 : i32
    %c896_i32 = arith.constant 896 : i32
    %131 = arith.addi %130, %c896_i32 : i32
    %132 = tpu.assume_multiple %131, 128 : i32
    %c0_44 = arith.constant 0 : index
    %133 = arith.index_cast %132 : i32 to index
    %134 = vector.load %arg2[%c0_44, %133] : memref<2x1024xf32, #tpu.memory_space<vmem>>, vector<2x128xf32>
    %c0_45 = arith.constant 0 : index
    %135 = arith.index_cast %132 : i32 to index
    %136 = vector.load %arg3[%c0_45, %135] : memref<2x1024xf32, #tpu.memory_space<vmem>>, vector<2x128xf32>
    %cst_46 = arith.constant 5.000000e-01 : f32
    %137 = vector.broadcast %cst_46 : f32 to vector<2x128xf32>
    %138 = arith.mulf %137, %134 : vector<2x128xf32>
    %139 = math.tanh %138 : vector<2x128xf32>
    %cst_47 = arith.constant 5.000000e-01 : f32
    %140 = vector.broadcast %cst_47 : f32 to vector<2x128xf32>
    %141 = arith.mulf %140, %139 : vector<2x128xf32>
    %cst_48 = arith.constant 5.000000e-01 : f32
    %142 = vector.broadcast %cst_48 : f32 to vector<2x128xf32>
    %143 = arith.addf %141, %142 : vector<2x128xf32>
    %144 = arith.mulf %143, %136 : vector<2x128xf32>
    %145 = arith.addf %127, %144 : vector<2x128xf32>
    %146 = arith.addf %128, %143 : vector<2x128xf32>
    %147 = arith.addf %129, %136 : vector<2x128xf32>
    %c1_i32 = arith.constant 1 : i32
    %c0_49 = arith.constant 0 : index
    %c0_50 = arith.constant 0 : index
    %c0_51 = arith.constant 0 : index
    %c0_52 = arith.constant 0 : index
    %148 = vector.load %arg4[%c0_49, %c0_50, %c0_51, %c0_52] : memref<1x3x2x128xf32, #tpu.memory_space<vmem>>, vector<1x1x2x128xf32>
    %149 = vector.shape_cast %148 : vector<1x1x2x128xf32> to vector<2x128xf32>
    %150 = arith.addf %149, %145 : vector<2x128xf32>
    %c0_53 = arith.constant 0 : index
    %c0_54 = arith.constant 0 : index
    %c0_55 = arith.constant 0 : index
    %c0_56 = arith.constant 0 : index
    %151 = vector.load %arg4[%c0_53, %c0_54, %c0_55, %c0_56] : memref<1x3x2x128xf32, #tpu.memory_space<vmem>>, vector<1x1x2x128xf32>
    %152 = vector.shape_cast %151 : vector<1x1x2x128xf32> to vector<2x128xf32>
    %153 = vector.shape_cast %150 : vector<2x128xf32> to vector<1x1x2x128xf32>
    tpu.vector_store %arg4[%c0_53, %c0_54, %c0_55, %c0_56], %153 {strides = array<i32>} : memref<1x3x2x128xf32, #tpu.memory_space<vmem>>, vector<1x1x2x128xf32>,
    %c0_57 = arith.constant 0 : index
    %c1 = arith.constant 1 : index
    %c0_58 = arith.constant 0 : index
    %c0_59 = arith.constant 0 : index
    %154 = vector.load %arg4[%c0_57, %c1, %c0_58, %c0_59] : memref<1x3x2x128xf32, #tpu.memory_space<vmem>>, vector<1x1x2x128xf32>
    %155 = vector.shape_cast %154 : vector<1x1x2x128xf32> to vector<2x128xf32>
    %156 = arith.addf %155, %146 : vector<2x128xf32>
    %c0_60 = arith.constant 0 : index
    %c1_61 = arith.constant 1 : index
    %c0_62 = arith.constant 0 : index
    %c0_63 = arith.constant 0 : index
    %157 = vector.load %arg4[%c0_60, %c1_61, %c0_62, %c0_63] : memref<1x3x2x128xf32, #tpu.memory_space<vmem>>, vector<1x1x2x128xf32>
    %158 = vector.shape_cast %157 : vector<1x1x2x128xf32> to vector<2x128xf32>
    %159 = vector.shape_cast %156 : vector<2x128xf32> to vector<1x1x2x128xf32>
    tpu.vector_store %arg4[%c0_60, %c1_61, %c0_62, %c0_63], %159 {strides = array<i32>} : memref<1x3x2x128xf32, #tpu.memory_space<vmem>>, vector<1x1x2x128xf32>,
    %c0_64 = arith.constant 0 : index
    %c2 = arith.constant 2 : index
    %c0_65 = arith.constant 0 : index
    %c0_66 = arith.constant 0 : index
    %160 = vector.load %arg4[%c0_64, %c2, %c0_65, %c0_66] : memref<1x3x2x128xf32, #tpu.memory_space<vmem>>, vector<1x1x2x128xf32>
    %161 = vector.shape_cast %160 : vector<1x1x2x128xf32> to vector<2x128xf32>
    %162 = arith.addf %161, %147 : vector<2x128xf32>
    %c0_67 = arith.constant 0 : index
    %c2_68 = arith.constant 2 : index
    %c0_69 = arith.constant 0 : index
    %c0_70 = arith.constant 0 : index
    %163 = vector.load %arg4[%c0_67, %c2_68, %c0_69, %c0_70] : memref<1x3x2x128xf32, #tpu.memory_space<vmem>>, vector<1x1x2x128xf32>
    %164 = vector.shape_cast %163 : vector<1x1x2x128xf32> to vector<2x128xf32>
    %165 = vector.shape_cast %162 : vector<2x128xf32> to vector<1x1x2x128xf32>
    tpu.vector_store %arg4[%c0_67, %c2_68, %c0_69, %c0_70], %165 {strides = array<i32>} : memref<1x3x2x128xf32, #tpu.memory_space<vmem>>, vector<1x1x2x128xf32>,
    return
  }
  func.func @transform_0(%arg0: i32, %arg1: i32) -> (i32, i32) {
    %c1_i32 = arith.constant 1 : i32
    %0 = arith.muli %arg0, %c1_i32 : i32
    %1 = arith.addi %0, %arg1 : i32
    %c0_i32 = arith.constant 0 : i32
    %c0_i32_0 = arith.constant 0 : i32
    return %c0_i32, %1 : i32, i32
  }
  func.func @transform_1(%arg0: i32, %arg1: i32) -> (i32, i32) {
    %c1_i32 = arith.constant 1 : i32
    %0 = arith.muli %arg0, %c1_i32 : i32
    %1 = arith.addi %0, %arg1 : i32
    %c0_i32 = arith.constant 0 : i32
    %c0_i32_0 = arith.constant 0 : i32
    return %c0_i32, %1 : i32, i32
  }
  func.func @transform_2(%arg0: i32, %arg1: i32) -> (i32, i32, i32, i32) {
    %c0_i32 = arith.constant 0 : i32
    %c0_i32_0 = arith.constant 0 : i32
    %c0_i32_1 = arith.constant 0 : i32
    %c0_i32_2 = arith.constant 0 : i32
    return %arg0, %c0_i32, %c0_i32_0, %c0_i32_1 : i32, i32, i32, i32
  }
}

</mosaic_0001>

<llo_original>
// kernel: tpu_custom_call.1
$region0: #{tpu_custom_call.1}
  #allocation0 [shape = 'u32[]', space=smem, size = 0x4, offset = 0x4, fixed_abs, tag = 'smem constant byte address 0x4 - core index']
  #allocation1 [shape = 'u32[144,128]{1,0:T(1,128)}', space=vmem, size = 0x12000, scoped, tag = 'internal scratch']
  %s0 = inlined_call_operand.hbm [shape: f32[2,1024], index: 0, kind: input, shape index: {}]
  %s1 = inlined_call_operand.hbm [shape: f32[2,1024], index: 1, kind: input, shape index: {}]
  %s2 = inlined_call_operand.hbm [shape: f32[1,3,2,128], index: 2, kind: output, shape index: {}]
  %s3 = sld [smem:[#allocation0]]
  $region30: #{tpu_custom_call.1} parent=0
    _
  %s5 = ssub.s32 1, %s3
  %s6 = scalar_select 0, %s5, %s3
  $region1: #{tpu_custom_call.1} parent=0
    #allocation2 [shape = 'u8[8192]{0}', space=vmem, size = 0x2000, scoped, tag = 'input window, operand 0, single buffered']
    #allocation3 [shape = 's32[1]{0}', space=sflag, size = 0x4, scoped, tag = 'scoped memory for tpu_custom_call.1']
    #allocation4 [shape = 's32[1]{0}', space=sflag, size = 0x4, scoped, tag = 'scoped memory for tpu_custom_call.1']
    #allocation5 [shape = 'u8[8192]{0}', space=vmem, size = 0x2000, scoped, tag = 'input window, operand 1, single buffered']
    #allocation6 [shape = 's32[1]{0}', space=sflag, size = 0x4, scoped, tag = 'scoped memory for tpu_custom_call.1']
    #allocation7 [shape = 'u8[3072]{0}', space=vmem, size = 0xc00, scoped, tag = 'output window, operand 0, single buffered']
    %7 = vsyncpa [#allocation3], 0
    %8 = vsyncpa [#allocation6], 0
    %9 = vsyncpa [#allocation4], 0
    // Predicated region
    $region2: #{tpu_custom_call.1} parent=1 // pred_check
      _
    $region3: #{tpu_custom_call.1} parent=1 // pred_check_branch
      %11 = sbr.rel (0) target = $region5
    $region4: #{tpu_custom_call.1} parent=1 // pred_region
      %s12 = sadd.s32 0, 0
      %s13 = smul.u32 8, %s12
      %s15 = ssub.s32 256, 256
      %16 = vsyncadd [#allocation3], %s15
      %s17 = smul.addr %s13, 32
      %s18 = scalar_lea.hbm %s0, %s17
      %s20 = sshll.u32 [#allocation2], 4
      %s21 = int_to_ptr.vmem [resolvable:$true] %s20
      %23 = dma.hbm_to_vmem [thread:$0]  %s18, 256, %s21, [#allocation3]
    $region5: #{tpu_custom_call.1} parent=1 // pred_fallthru
      _
    // Predicated region
    $region6: #{tpu_custom_call.1} parent=1 // pred_check
      _
    $region7: #{tpu_custom_call.1} parent=1 // pred_check_branch
      %25 = sbr.rel (0) target = $region9
    $region8: #{tpu_custom_call.1} parent=1 // pred_region
      %s26 = sadd.s32 0, 0
      %s27 = smul.u32 8, %s26
      %s29 = ssub.s32 256, 256
      %30 = vsyncadd [#allocation6], %s29
      %s31 = smul.addr %s27, 32
      %s32 = scalar_lea.hbm %s1, %s31
      %s34 = sshll.u32 [#allocation5], 4
      %s35 = int_to_ptr.vmem [resolvable:$true] %s34
      %37 = dma.hbm_to_vmem [thread:$0]  %s32, 256, %s35, [#allocation6]
    $region9: #{tpu_custom_call.1} parent=1 // pred_fallthru
      _
    // Predicated region
    $region10: #{tpu_custom_call.1} parent=1 // pred_check
      _
    $region11: #{tpu_custom_call.1} parent=1 // pred_check_branch
      %39 = sbr.rel (0) target = $region13
    $region12: #{tpu_custom_call.1} parent=1 // pred_region
      %40 = dma.done [#allocation3], 256
    $region13: #{tpu_custom_call.1} parent=1 // pred_fallthru
      _
    // Predicated region
    $region14: #{tpu_custom_call.1} parent=1 // pred_check
      _
    $region15: #{tpu_custom_call.1} parent=1 // pred_check_branch
      %42 = sbr.rel (0) target = $region17
    $region16: #{tpu_custom_call.1} parent=1 // pred_region
      %43 = dma.done [#allocation6], 256
    $region17: #{tpu_custom_call.1} parent=1 // pred_fallthru
      _
    %s44 = sadd.s32 0, 0
    %s45 = smul.u32 8, %s44
    %s46 = sadd.s32 0, 0
    %s47 = smul.u32 8, %s46
    %p48 = scmp.eq.s32.totalorder 0, 0
    // Predicated region
    $region18: #{tpu_custom_call.1} parent=1 // pred_check
      %p49 = pneg %p48
    $region19: #{tpu_custom_call.1} parent=1 // pred_check_branch
      %51 = sbr.rel (%p49) target = $region21
    $region20: #{tpu_custom_call.1} parent=1 // pred_region
      %52 = vst [vmem:[#allocation7] sm:$0x3] 0.0
      %53 = vst [vmem:[#allocation7 + $0x2] sm:$0x3] 0.0
      %54 = vst [vmem:[#allocation7 + $0x4] sm:$0x3] 0.0
    $region21: #{tpu_custom_call.1} parent=1 // pred_fallthru
      _
    %v55 = vld [vmem:[#allocation2] sm:$0x3]
    %v56 = vld [vmem:[#allocation5] sm:$0x3]
    %v57 = vmul.f32 %v55, 0.5
    %v58 = vtanh.pop %v57
    %v59 = vmul.f32 %v58, 0.5
    %v60 = vadd.f32 %v59, 0.5
    %v61 = vmul.f32 %v60, %v56
    %v62 = vadd.f32 %v61, 0.0
    %v63 = vadd.f32 %v60, 0.0
    %v64 = vadd.f32 %v56, 0.0
    %s65 = scalar_lea.vmem [#allocation2], 2
    %v66 = vld [vmem:[%s65] sm:$0x3]
    %s67 = scalar_lea.vmem [#allocation5], 2
    %v68 = vld [vmem:[%s67] sm:$0x3]
    %v69 = vmul.f32 %v66, 0.5
    %v70 = vtanh.pop %v69
    %v71 = vmul.f32 %v70, 0.5
    %v72 = vadd.f32 %v71, 0.5
    %v73 = vmul.f32 %v72, %v68
    %v74 = vadd.f32 %v62, %v73
    %v75 = vadd.f32 %v63, %v72
    %v76 = vadd.f32 %v64, %v68
    %s77 = scalar_lea.vmem [#allocation2], 4
    %v78 = vld [vmem:[%s77] sm:$0x3]
    %s79 = scalar_lea.vmem [#allocation5], 4
    %v80 = vld [vmem:[%s79] sm:$0x3]
    %v81 = vmul.f32 %v78, 0.5
    %v82 = vtanh.pop %v81
    %v83 = vmul.f32 %v82, 0.5
    %v84 = vadd.f32 %v83, 0.5
    %v85 = vmul.f32 %v84, %v80
    %v86 = vadd.f32 %v74, %v85
    %v87 = vadd.f32 %v75, %v84
    %v88 = vadd.f32 %v76, %v80
    %s89 = scalar_lea.vmem [#allocation2], 6
    %v90 = vld [vmem:[%s89] sm:$0x3]
    %s91 = scalar_lea.vmem [#allocation5], 6
    %v92 = vld [vmem:[%s91] sm:$0x3]
    %v93 = vmul.f32 %v90, 0.5
    %v94 = vtanh.pop %v93
    %v95 = vmul.f32 %v94, 0.5
    %v96 = vadd.f32 %v95, 0.5
    %v97 = vmul.f32 %v96, %v92
    %v98 = vadd.f32 %v86, %v97
    %v99 = vadd.f32 %v87, %v96
    %v100 = vadd.f32 %v88, %v92
    %s101 = scalar_lea.vmem [#allocation2], 8
    %v102 = vld [vmem:[%s101] sm:$0x3]
    %s103 = scalar_lea.vmem [#allocation5], 8
    %v104 = vld [vmem:[%s103] sm:$0x3]
    %v105 = vmul.f32 %v102, 0.5
    %v106 = vtanh.pop %v105
    %v107 = vmul.f32 %v106, 0.5
    %v108 = vadd.f32 %v107, 0.5
    %v109 = vmul.f32 %v108, %v104
    %v110 = vadd.f32 %v98, %v109
    %v111 = vadd.f32 %v99, %v108
    %v112 = vadd.f32 %v100, %v104
    %s113 = scalar_lea.vmem [#allocation2], 10
    %v114 = vld [vmem:[%s113] sm:$0x3]
    %s115 = scalar_lea.vmem [#allocation5], 10
    %v116 = vld [vmem:[%s115] sm:$0x3]
    %v117 = vmul.f32 %v114, 0.5
    %v118 = vtanh.pop %v117
    %v119 = vmul.f32 %v118, 0.5
    %v120 = vadd.f32 %v119, 0.5
    %v121 = vmul.f32 %v120, %v116
    %v122 = vadd.f32 %v110, %v121
    %v123 = vadd.f32 %v111, %v120
    %v124 = vadd.f32 %v112, %v116
    %s125 = scalar_lea.vmem [#allocation2], 12
    %v126 = vld [vmem:[%s125] sm:$0x3]
    %s127 = scalar_lea.vmem [#allocation5], 12
    %v128 = vld [vmem:[%s127] sm:$0x3]
    %v129 = vmul.f32 %v126, 0.5
    %v130 = vtanh.pop %v129
    %v131 = vmul.f32 %v130, 0.5
    %v132 = vadd.f32 %v131, 0.5
    %v133 = vmul.f32 %v132, %v128
    %v134 = vadd.f32 %v122, %v133
    %v135 = vadd.f32 %v123, %v132
    %v136 = vadd.f32 %v124, %v128
    %s137 = scalar_lea.vmem [#allocation2], 14
    %v138 = vld [vmem:[%s137] sm:$0x3]
    %s139 = scalar_lea.vmem [#allocation5], 14
    %v140 = vld [vmem:[%s139] sm:$0x3]
    %v141 = vmul.f32 %v138, 0.5
    %v142 = vtanh.pop %v141
    %v143 = vmul.f32 %v142, 0.5
    %v144 = vadd.f32 %v143, 0.5
    %v145 = vmul.f32 %v144, %v140
    %v146 = vadd.f32 %v134, %v145
    %v147 = vadd.f32 %v135, %v144
    %v148 = vadd.f32 %v136, %v140
    %v149 = vld [vmem:[#allocation7] sm:$0x3]
    %v150 = vadd.f32 %v149, %v146
    %151 = vst [vmem:[#allocation7] sm:$0x3] %v150
    %s152 = scalar_lea.vmem [#allocation7], 2
    %v153 = vld [vmem:[%s152] sm:$0x3]
    %v154 = vadd.f32 %v153, %v147
    %155 = vst [vmem:[%s152] sm:$0x3] %v154
    %s156 = scalar_lea.vmem [#allocation7], 4
    %v157 = vld [vmem:[%s156] sm:$0x3]
    %v158 = vadd.f32 %v157, %v148
    %159 = vst [vmem:[%s156] sm:$0x3] %v158
    // Predicated region
    $region22: #{tpu_custom_call.1} parent=1 // pred_check
      _
    $region23: #{tpu_custom_call.1} parent=1 // pred_check_branch
      %161 = sbr.rel (0) target = $region25
    $region24: #{tpu_custom_call.1} parent=1 // pred_region
      %s163 = ssub.s32 96, 96
      %164 = vsyncadd [#allocation4], %s163
      %s165 = sshll.u32 [#allocation7], 4
      %s166 = int_to_ptr.vmem [resolvable:$true] %s165
      %171 = dma.vmem_to_hbm [thread:$0]  %s166, 96, %s2, [#allocation4], 32, 32, 2
    $region25: #{tpu_custom_call.1} parent=1 // pred_fallthru
      _
    // Predicated region
    $region26: #{tpu_custom_call.1} parent=1 // pred_check
      _
    $region27: #{tpu_custom_call.1} parent=1 // pred_check_branch
      %173 = sbr.rel (0) target = $region29
    $region28: #{tpu_custom_call.1} parent=1 // pred_region
      %174 = dma.done [#allocation4], 96
    $region29: #{tpu_custom_call.1} parent=1 // pred_fallthru
      _
    %175 = vsyncpa [#allocation3], 1
    %176 = vsyncpa [#allocation6], 1
    %177 = vsyncpa [#allocation4], 1

</llo_original>
